<compile_context>
chip_gen: v7x
topology: tpu7x:2x2x1
jax: 0.10.0
libtpu: 0.0.40
codegen_flags: <defaults>
</compile_context>

<pallas_src>
import jax
import jax.numpy as jnp
from jax import lax
from jax.experimental import pallas as pl
from jax.experimental.pallas import tpu as pltpu

N_AUX = 4
N_IN = 16
N_HIDDEN = 32
N_OUT = 8
BATCH = 200          # deliberately not a multiple of the batch tile
BATCH_TILE = 128


def lasermon_kernel(x_ref, aux_ref, wfull_ref, wpt_ref, bpt_ref, o_ref):
    # x_ref:     (TB, n_in)                      batch tile of inputs
    # aux_ref:   (TB, n_aux)                     batch tile of aux inputs
    # wfull_ref: ((n_aux+1)*(n_in+1), n_hidden)  fused hypernet weights (resident)
    # wpt_ref:   (n_out, n_hidden)               pred_network weight^T (resident)
    # bpt_ref:   (n_out, 1)                      pred_network bias^T   (resident)
    # o_ref:     (n_out, TB)                     transposed output tile (lane-dense)
    x = x_ref[...]
    aux = aux_ref[...]
    tb = x.shape[0]
    n_aux = aux.shape[1]

    ones = jnp.ones((tb, 1), jnp.float32)
    x_aug = jnp.concatenate([x, ones], axis=-1)                  # (TB, n_in+1)

    # Z[b, a*(n_in+1)+i] = aux_e[b,a] * x_aug[b,i], with aux_e = [aux | 1].
    # Tiny VPU outer product built along the lane axis (no reshapes through
    # memory, no per-sample loop).
    z_parts = [aux[:, a:a + 1] * x_aug for a in range(n_aux)]
    z_parts.append(x_aug)                                        # "1" aux column -> ba rows
    z = jnp.concatenate(z_parts, axis=-1)                        # (TB, (n_aux+1)*(n_in+1))

    # aux_netowrk + DotMaskLayer affine fused into one MXU matmul, then mask.
    h = jnp.dot(z, wfull_ref[...], preferred_element_type=jnp.float32)  # (TB, n_hidden)
    h = h * aux[:, n_aux - 1:n_aux]                              # mask = aux_in[:, -1]

    # pred_network, emitted transposed: o_t[n,b] = sum_h WpT[n,h] * H[b,h] + bp[n]
    o_t = lax.dot_general(
        wpt_ref[...], h,
        dimension_numbers=(((1,), (1,)), ((), ())),
        preferred_element_type=jnp.float32)                      # (n_out, TB)
    o_ref[...] = o_t + bpt_ref[...]


def lasermon_forward(x, aux, Wa, ba, Wp, bp, *, batch_tile=BATCH_TILE):
    B, n_in = x.shape
    n_aux = aux.shape[1]
    n_hidden, n_out = Wp.shape
    kfull = (n_aux + 1) * (n_in + 1)

    # Host-side re-permutation of the hypernetwork parameters (a parameter
    # transform; under jit it is trivially cheap / constant-folded):
    #   Wfull[a*(n_in+1)+i, h]     = Wa[a, i*n_hidden+h]    for a < n_aux
    #   Wfull[n_aux*(n_in+1)+i, h] = ba[0, i*n_hidden+h]
    Wa3 = Wa.reshape(n_aux, n_in + 1, n_hidden)
    Bb3 = ba.reshape(1, n_in + 1, n_hidden)
    Wfull = jnp.concatenate([Wa3, Bb3], axis=0).reshape(kfull, n_hidden)
    WpT = Wp.T                        # (n_out, n_hidden)
    bpT = bp.reshape(n_out, 1)        # (n_out, 1)

    # Pad batch to a multiple of the batch tile (padded rows sliced off below).
    tb = batch_tile
    b_pad = pl.cdiv(B, tb) * tb
    if b_pad != B:
        x = jnp.pad(x, ((0, b_pad - B), (0, 0)))
        aux = jnp.pad(aux, ((0, b_pad - B), (0, 0)))

    flops = 2 * b_pad * (kfull * n_hidden + n_hidden * n_out)
    bytes_accessed = 4 * (b_pad * (n_in + n_aux + n_out)
                          + kfull * n_hidden + n_hidden * n_out + n_out)

    out_t = pl.pallas_call(
        lasermon_kernel,
        out_shape=jax.ShapeDtypeStruct((n_out, b_pad), jnp.float32),
        grid_spec=pltpu.PrefetchScalarGridSpec(
            num_scalar_prefetch=0,
            grid=(b_pad // tb,),
            in_specs=[
                pl.BlockSpec((tb, n_in), lambda i: (i, 0)),
                pl.BlockSpec((tb, n_aux), lambda i: (i, 0)),
                # Weights: constant block index -> DMA'd once, stay resident.
                pl.BlockSpec((kfull, n_hidden), lambda i: (0, 0)),
                pl.BlockSpec((n_out, n_hidden), lambda i: (0, 0)),
                pl.BlockSpec((n_out, 1), lambda i: (0, 0)),
            ],
            out_specs=pl.BlockSpec((n_out, tb), lambda i: (0, i)),
        ),
        compiler_params=pltpu.CompilerParams(
            dimension_semantics=("parallel",)),
        cost_estimate=pl.CostEstimate(
            flops=flops, transcendentals=0, bytes_accessed=bytes_accessed),
    )(x, aux, Wfull, WpT, bpT)

    # Un-pad and return in the module's (B, n_out) layout.
    return out_t[:, :B].T


def lasermon_reference(x, aux, Wa, ba, Wp, bp):
    """Pure-JAX reference of the same forward pass (high precision)."""
    B, n_in = x.shape
    n_hidden = Wp.shape[0]
    hi = lax.Precision.HIGHEST
    W = jnp.dot(aux, Wa, precision=hi) + ba                   # (B, n_hidden*(n_in+1))
    W3 = W.reshape(B, n_in + 1, n_hidden)
    x_aug = jnp.concatenate([x, jnp.ones((B, 1), x.dtype)], axis=1)
    H = jnp.einsum('bi,bih->bh', x_aug, W3, precision=hi) * aux[:, -1:]
    return jnp.dot(H, Wp, precision=hi) + bp


if __name__ == "__main__":
    key = jax.random.PRNGKey(0)
    kx, ka, kwa, kba, kwp, kbp = jax.random.split(key, 6)

    # Deterministic synthetic parameters (PyTorch-Linear-like scale).
    wa_dim = N_HIDDEN * (N_IN + 1)
    Wa = jax.random.uniform(kwa, (N_AUX, wa_dim), jnp.float32,
                            minval=-1.0, maxval=1.0) / jnp.sqrt(N_AUX)
    ba = jax.random.uniform(kba, (1, wa_dim), jnp.float32,
                            minval=-1.0, maxval=1.0) / jnp.sqrt(N_AUX)
    Wp = jax.random.uniform(kwp, (N_HIDDEN, N_OUT), jnp.float32,
                            minval=-1.0, maxval=1.0) / jnp.sqrt(N_HIDDEN)
    bp = jax.random.uniform(kbp, (1, N_OUT), jnp.float32,
                            minval=-1.0, maxval=1.0) / jnp.sqrt(N_HIDDEN)

    # Example inputs.
    x = jax.random.normal(kx, (BATCH, N_IN), jnp.float32)
    aux = jax.random.normal(ka, (BATCH, N_AUX), jnp.float32)

    out = lasermon_forward(x, aux, Wa, ba, Wp, bp, batch_tile=BATCH_TILE)
    out = jax.block_until_ready(out)

    ref = lasermon_reference(x, aux, Wa, ba, Wp, bp)
    assert out.shape == (BATCH, N_OUT)
    assert jnp.allclose(out, ref, atol=1e-3, rtol=1e-3), "mismatch vs reference"

    print("KERNEL_OK")
</pallas_src>

<mosaic_0001>
module attributes {stable_mosaic.version = 11 : i64} {
  func.func @lasermon_kernel(%arg0: i32, %arg1: memref<128x16xf32, #tpu.memory_space<vmem>>, %arg2: memref<128x4xf32, #tpu.memory_space<vmem>>, %arg3: memref<85x32xf32, #tpu.memory_space<vmem>>, %arg4: memref<8x32xf32, #tpu.memory_space<vmem>>, %arg5: memref<8x1xf32, #tpu.memory_space<vmem>>, %arg6: memref<8x128xf32, #tpu.memory_space<vmem>>) attributes {dimension_semantics = [#tpu.dimension_semantics<parallel>], iteration_bounds = array<i64: 2>, scalar_prefetch = 0 : i64, scratch_operands = 0 : i64, tpu.core_type = #tpu.core_type<tc>, window_params = [{transform_indices = @transform_0, window_bounds = array<i64: 128, 16>}, {transform_indices = @transform_1, window_bounds = array<i64: 128, 4>}, {pipeline_mode = #tpu.pipeline_mode<synchronous>, transform_indices = @transform_2, window_bounds = array<i64: 85, 32>}, {pipeline_mode = #tpu.pipeline_mode<synchronous>, transform_indices = @transform_3, window_bounds = array<i64: 8, 32>}, {pipeline_mode = #tpu.pipeline_mode<synchronous>, transform_indices = @transform_4, window_bounds = array<i64: 8, 1>}, {transform_indices = @transform_5, window_bounds = array<i64: 8, 128>}]} {
    %c0 = arith.constant 0 : index
    %c0_0 = arith.constant 0 : index
    %0 = vector.load %arg1[%c0, %c0_0] : memref<128x16xf32, #tpu.memory_space<vmem>>, vector<128x16xf32>
    %c0_1 = arith.constant 0 : index
    %c0_2 = arith.constant 0 : index
    %1 = vector.load %arg2[%c0_1, %c0_2] : memref<128x4xf32, #tpu.memory_space<vmem>>, vector<128x4xf32>
    %cst = arith.constant 1.000000e+00 : f32
    %2 = vector.broadcast %cst : f32 to vector<128x1xf32>
    %3 = tpu.concatenate %0, %2 in 1 : vector<128x16xf32>, vector<128x1xf32> -> vector<128x17xf32>
    %4 = vector.extract_strided_slice %1 {offsets = [0, 0], sizes = [128, 1], strides = [1, 1]} : vector<128x4xf32> to vector<128x1xf32>
    %5 = vector.broadcast %4 : vector<128x1xf32> to vector<128x17xf32>
    %6 = arith.mulf %5, %3 : vector<128x17xf32>
    %7 = vector.extract_strided_slice %1 {offsets = [0, 1], sizes = [128, 1], strides = [1, 1]} : vector<128x4xf32> to vector<128x1xf32>
    %8 = vector.broadcast %7 : vector<128x1xf32> to vector<128x17xf32>
    %9 = arith.mulf %8, %3 : vector<128x17xf32>
    %10 = vector.extract_strided_slice %1 {offsets = [0, 2], sizes = [128, 1], strides = [1, 1]} : vector<128x4xf32> to vector<128x1xf32>
    %11 = vector.broadcast %10 : vector<128x1xf32> to vector<128x17xf32>
    %12 = arith.mulf %11, %3 : vector<128x17xf32>
    %13 = vector.extract_strided_slice %1 {offsets = [0, 3], sizes = [128, 1], strides = [1, 1]} : vector<128x4xf32> to vector<128x1xf32>
    %14 = vector.broadcast %13 : vector<128x1xf32> to vector<128x17xf32>
    %15 = arith.mulf %14, %3 : vector<128x17xf32>
    %16 = tpu.concatenate %6, %9, %12, %15, %3 in 1 : vector<128x17xf32>, vector<128x17xf32>, vector<128x17xf32>, vector<128x17xf32>, vector<128x17xf32> -> vector<128x85xf32>
    %c0_3 = arith.constant 0 : index
    %c0_4 = arith.constant 0 : index
    %17 = vector.load %arg3[%c0_3, %c0_4] : memref<85x32xf32, #tpu.memory_space<vmem>>, vector<85x32xf32>
    %cst_5 = arith.constant dense<0.000000e+00> : vector<128x32xf32>
    %18 = tpu.matmul %16, %17, %cst_5 {dimension_numbers = #tpu.dot_dimension_numbers<[1], [0], [0], [1], [0, 0, 1, 1], [], []>} : vector<128x85xf32>, vector<85x32xf32>, vector<128x32xf32> -> vector<128x32xf32>
    %19 = vector.extract_strided_slice %1 {offsets = [0, 3], sizes = [128, 1], strides = [1, 1]} : vector<128x4xf32> to vector<128x1xf32>
    %20 = vector.broadcast %19 : vector<128x1xf32> to vector<128x32xf32>
    %21 = arith.mulf %18, %20 : vector<128x32xf32>
    %c0_6 = arith.constant 0 : index
    %c0_7 = arith.constant 0 : index
    %22 = vector.load %arg4[%c0_6, %c0_7] : memref<8x32xf32, #tpu.memory_space<vmem>>, vector<8x32xf32>
    %cst_8 = arith.constant dense<0.000000e+00> : vector<8x128xf32>
    %23 = tpu.matmul %22, %21, %cst_8 {dimension_numbers = #tpu.dot_dimension_numbers<[1], [1], [0], [0], [0, 0, 1, 0], [], []>} : vector<8x32xf32>, vector<128x32xf32>, vector<8x128xf32> -> vector<8x128xf32>
    %c0_9 = arith.constant 0 : index
    %c0_10 = arith.constant 0 : index
    %24 = vector.load %arg5[%c0_9, %c0_10] : memref<8x1xf32, #tpu.memory_space<vmem>>, vector<8x1xf32>
    %25 = vector.broadcast %24 : vector<8x1xf32> to vector<8x128xf32>
    %26 = arith.addf %23, %25 : vector<8x128xf32>
    %c0_11 = arith.constant 0 : index
    %c0_12 = arith.constant 0 : index
    %27 = vector.load %arg6[%c0_11, %c0_12] : memref<8x128xf32, #tpu.memory_space<vmem>>, vector<8x128xf32>
    tpu.vector_store %arg6[%c0_11, %c0_12], %26 {strides = array<i32>} : memref<8x128xf32, #tpu.memory_space<vmem>>, vector<8x128xf32>,
    return
  }
  func.func @transform_0(%arg0: i32) -> (i32, i32) {
    %c0_i32 = arith.constant 0 : i32
    %c0_i32_0 = arith.constant 0 : i32
    return %arg0, %c0_i32 : i32, i32
  }
  func.func @transform_1(%arg0: i32) -> (i32, i32) {
    %c0_i32 = arith.constant 0 : i32
    %c0_i32_0 = arith.constant 0 : i32
    return %arg0, %c0_i32 : i32, i32
  }
  func.func @transform_2(%arg0: i32) -> (i32, i32) {
    %c0_i32 = arith.constant 0 : i32
    %c0_i32_0 = arith.constant 0 : i32
    %c0_i32_1 = arith.constant 0 : i32
    return %c0_i32, %c0_i32_0 : i32, i32
  }
  func.func @transform_3(%arg0: i32) -> (i32, i32) {
    %c0_i32 = arith.constant 0 : i32
    %c0_i32_0 = arith.constant 0 : i32
    %c0_i32_1 = arith.constant 0 : i32
    return %c0_i32, %c0_i32_0 : i32, i32
  }
  func.func @transform_4(%arg0: i32) -> (i32, i32) {
    %c0_i32 = arith.constant 0 : i32
    %c0_i32_0 = arith.constant 0 : i32
    %c0_i32_1 = arith.constant 0 : i32
    return %c0_i32, %c0_i32_0 : i32, i32
  }
  func.func @transform_5(%arg0: i32) -> (i32, i32) {
    %c0_i32 = arith.constant 0 : i32
    %c0_i32_0 = arith.constant 0 : i32
    return %c0_i32, %arg0 : i32, i32
  }
}

</mosaic_0001>

<llo_original>
// kernel: tpu_custom_call.1
$region0: #{tpu_custom_call.1}
  #allocation0 [shape = 'u32[]', space=smem, size = 0x4, offset = 0x4, fixed_abs, tag = 'smem constant byte address 0x4 - core index']
  #allocation1 [shape = 'u32[144,128]{1,0:T(1,128)}', space=vmem, size = 0x12000, scoped, tag = 'internal scratch']
  %s0 = inlined_call_operand.vmem [shape: f32[256,16], index: 0, kind: input, shape index: {}]
  %s1 = inlined_call_operand.vmem [shape: f32[256,4], index: 1, kind: input, shape index: {}]
  %s2 = inlined_call_operand.vmem [shape: f32[85,32], index: 2, kind: input, shape index: {}]
  %s3 = inlined_call_operand.vmem [shape: f32[8,32], index: 3, kind: input, shape index: {}]
  %s4 = inlined_call_operand.vmem [shape: f32[8,1], index: 4, kind: input, shape index: {}]
  %s5 = inlined_call_operand.hbm [shape: f32[8,256], index: 5, kind: output, shape index: {}]
  %s6 = sld [smem:[#allocation0]]
  $region53: #{tpu_custom_call.1} parent=0
    _
  %s8 = ssub.s32 1, %s6
  %s9 = scalar_select 0, %s8, %s6
  $region1: #{tpu_custom_call.1} parent=0
    #allocation2 [shape = 'u8[8192]{0}', space=vmem, size = 0x2000, scoped, tag = 'output window, operand 0']
    #allocation3 [shape = 's32[2]{0}', space=sflag, size = 0x8, scoped, tag = 'scoped memory for tpu_custom_call.1']
    %10 = vsyncpa [#allocation3], 0
    %s11 = scalar_lea.sflag [#allocation3], 1
    %12 = vsyncpa %s11, 0
    loop: start=0, step=1, limit=4
    $region2: #{tpu_custom_call.1} parent=1 // loop_pre_header
      _
    $region3: #{tpu_custom_call.1} parent=1 // loop_header
      %s14 = sphi 0, %s18
      %p15 = scmp.ge.s32.totalorder %s14, 4
      %s24 = sphi 0, %s26
      %s27 = sphi 0, %s24
      %s28 = sphi 0, %s27
      %s44 = sphi 0, %s28
      %s50 = sphi 0, %s52
      %s53 = sphi 0, %s50
      %s54 = sphi 0, %s53
      %s70 = sphi 0, %s54
      %s74 = sphi 0, %s74
      %s76 = sphi 0, %s74
      %s77 = sphi 0, %s76
      %s91 = sphi 0, %s77
      %s95 = sphi 0, %s95
      %s97 = sphi 0, %s95
      %s98 = sphi 0, %s97
      %s112 = sphi 0, %s98
      %s116 = sphi 0, %s116
      %s118 = sphi 0, %s116
      %s119 = sphi 0, %s118
      %s133 = sphi 0, %s119
      %s139 = sphi 0, %s141
      %s142 = sphi 0, %s139
      %s143 = sphi 0, %s142
      %s159 = sphi 0, %s143
    $region4: #{tpu_custom_call.1} parent=1 // loop_header_branch
      %17 = sbr.rel (%p15) target = $region8
    $region5: #{tpu_custom_call.1} parent=1 // loop_body
      %s19 = ssub.s32 %s14, 1
      %s20 = ssub.s32 %s14, 2
      %s21 = sadd.s32 %s14, 1
      %s22 = ssub.s32 %s14, %s21
      %p23 = scmp.eq.s32.totalorder %s22, 0
      %s25 = sadd.s32 %s24, 1
      %s26 = scalar_select %p23, %s24, %s25
      %p29 = pneg %p23
      %p30 = scmp.eq.s32.totalorder %s14, 1
      %p31 = por %p29, %p30
      %p32 = scmp.ne.s32.totalorder %s24, %s27
      %p33 = scmp.eq.s32.totalorder %s14, 0
      %p34 = por %p32, %p33
      %p35 = scmp.ne.s32.totalorder %s24, %s27
      %p36 = scmp.eq.s32.totalorder %s19, 1
      %p37 = por %p35, %p36
      %p38 = scmp.ne.s32.totalorder %s27, %s28
      %p39 = scmp.eq.s32.totalorder %s19, 0
      %p40 = por %p38, %p39
      %p41 = scmp.ne.s32.totalorder %s27, %s28
      %p42 = scmp.eq.s32.totalorder %s20, 1
      %p43 = por %p41, %p42
      %p45 = scmp.ne.s32.totalorder %s28, %s44
      %p46 = scmp.eq.s32.totalorder %s20, 0
      %p47 = por %p45, %p46
      %s48 = ssub.s32 %s14, %s21
      %p49 = scmp.eq.s32.totalorder %s48, 0
      %s51 = sadd.s32 %s50, 1
      %s52 = scalar_select %p49, %s50, %s51
      %p55 = pneg %p49
      %p56 = scmp.eq.s32.totalorder %s14, 1
      %p57 = por %p55, %p56
      %p58 = scmp.ne.s32.totalorder %s50, %s53
      %p59 = scmp.eq.s32.totalorder %s14, 0
      %p60 = por %p58, %p59
      %p61 = scmp.ne.s32.totalorder %s50, %s53
      %p62 = scmp.eq.s32.totalorder %s19, 1
      %p63 = por %p61, %p62
      %p64 = scmp.ne.s32.totalorder %s53, %s54
      %p65 = scmp.eq.s32.totalorder %s19, 0
      %p66 = por %p64, %p65
      %p67 = scmp.ne.s32.totalorder %s53, %s54
      %p68 = scmp.eq.s32.totalorder %s20, 1
      %p69 = por %p67, %p68
      %p71 = scmp.ne.s32.totalorder %s54, %s70
      %p72 = scmp.eq.s32.totalorder %s20, 0
      %p73 = por %p71, %p72
      %s75 = sadd.s32 %s74, 1
      %p78 = scmp.eq.s32.totalorder %s14, 1
      %p79 = scmp.ne.s32.totalorder %s74, %s76
      %p80 = scmp.eq.s32.totalorder %s14, 0
      %p81 = por %p79, %p80
      %p82 = scmp.ne.s32.totalorder %s74, %s76
      %p83 = scmp.eq.s32.totalorder %s19, 1
      %p84 = por %p82, %p83
      %p85 = scmp.ne.s32.totalorder %s76, %s77
      %p86 = scmp.eq.s32.totalorder %s19, 0
      %p87 = por %p85, %p86
      %p88 = scmp.ne.s32.totalorder %s76, %s77
      %p89 = scmp.eq.s32.totalorder %s20, 1
      %p90 = por %p88, %p89
      %p92 = scmp.ne.s32.totalorder %s77, %s91
      %p93 = scmp.eq.s32.totalorder %s20, 0
      %p94 = por %p92, %p93
      %s96 = sadd.s32 %s95, 1
      %p99 = scmp.eq.s32.totalorder %s14, 1
      %p100 = scmp.ne.s32.totalorder %s95, %s97
      %p101 = scmp.eq.s32.totalorder %s14, 0
      %p102 = por %p100, %p101
      %p103 = scmp.ne.s32.totalorder %s95, %s97
      %p104 = scmp.eq.s32.totalorder %s19, 1
      %p105 = por %p103, %p104
      %p106 = scmp.ne.s32.totalorder %s97, %s98
      %p107 = scmp.eq.s32.totalorder %s19, 0
      %p108 = por %p106, %p107
      %p109 = scmp.ne.s32.totalorder %s97, %s98
      %p110 = scmp.eq.s32.totalorder %s20, 1
      %p111 = por %p109, %p110
      %p113 = scmp.ne.s32.totalorder %s98, %s112
      %p114 = scmp.eq.s32.totalorder %s20, 0
      %p115 = por %p113, %p114
      %s117 = sadd.s32 %s116, 1
      %p120 = scmp.eq.s32.totalorder %s14, 1
      %p121 = scmp.ne.s32.totalorder %s116, %s118
      %p122 = scmp.eq.s32.totalorder %s14, 0
      %p123 = por %p121, %p122
      %p124 = scmp.ne.s32.totalorder %s116, %s118
      %p125 = scmp.eq.s32.totalorder %s19, 1
      %p126 = por %p124, %p125
      %p127 = scmp.ne.s32.totalorder %s118, %s119
      %p128 = scmp.eq.s32.totalorder %s19, 0
      %p129 = por %p127, %p128
      %p130 = scmp.ne.s32.totalorder %s118, %s119
      %p131 = scmp.eq.s32.totalorder %s20, 1
      %p132 = por %p130, %p131
      %p134 = scmp.ne.s32.totalorder %s119, %s133
      %p135 = scmp.eq.s32.totalorder %s20, 0
      %p136 = por %p134, %p135
      %s137 = ssub.s32 %s14, %s21
      %p138 = scmp.eq.s32.totalorder %s137, 0
      %s140 = sadd.s32 %s139, 1
      %s141 = scalar_select %p138, %s139, %s140
      %p144 = pneg %p138
      %p145 = scmp.eq.s32.totalorder %s14, 1
      %p146 = por %p144, %p145
      %p147 = scmp.ne.s32.totalorder %s139, %s142
      %p148 = scmp.eq.s32.totalorder %s14, 0
      %p149 = por %p147, %p148
      %p150 = scmp.ne.s32.totalorder %s139, %s142
      %p151 = scmp.eq.s32.totalorder %s19, 1
      %p152 = por %p150, %p151
      %p153 = scmp.ne.s32.totalorder %s142, %s143
      %p154 = scmp.eq.s32.totalorder %s19, 0
      %p155 = por %p153, %p154
      %p156 = scmp.ne.s32.totalorder %s142, %s143
      %p157 = scmp.eq.s32.totalorder %s20, 1
      %p158 = por %p156, %p157
      %p160 = scmp.ne.s32.totalorder %s143, %s159
      %p161 = scmp.eq.s32.totalorder %s20, 0
      %p162 = por %p160, %p161
      %p163 = scmp.le.s32.totalorder 1, %s14
      %p164 = scmp.lt.s32.totalorder %s14, 3
      %p165 = pnand %p163, %p164
      %p166 = pneg %p165
      // Predicated region
      $region9: #{tpu_custom_call.1} parent=5 // pred_check
        _
      $region10: #{tpu_custom_call.1} parent=5 // pred_check_branch
        %168 = sbr.rel (%p165) target = $region12
      $region11: #{tpu_custom_call.1} parent=5 // pred_region
        %s169 = ssub.s32 %s14, 1
        // Predicated region
        $region13: #{tpu_custom_call.1} parent=11 // pred_check
          %p170 = pneg %p87
        $region14: #{tpu_custom_call.1} parent=11 // pred_check_branch
          %172 = sbr.rel (%p170) target = $region16
        $region15: #{tpu_custom_call.1} parent=11 // pred_region
          _
        $region16: #{tpu_custom_call.1} parent=11 // pred_fallthru
          _
        // Predicated region
        $region17: #{tpu_custom_call.1} parent=11 // pred_check
          %p173 = pneg %p108
        $region18: #{tpu_custom_call.1} parent=11 // pred_check_branch
          %175 = sbr.rel (%p173) target = $region20
        $region19: #{tpu_custom_call.1} parent=11 // pred_region
          _
        $region20: #{tpu_custom_call.1} parent=11 // pred_fallthru
          _
        // Predicated region
        $region21: #{tpu_custom_call.1} parent=11 // pred_check
          %p176 = pneg %p129
        $region22: #{tpu_custom_call.1} parent=11 // pred_check_branch
          %178 = sbr.rel (%p176) target = $region24
        $region23: #{tpu_custom_call.1} parent=11 // pred_region
          _
        $region24: #{tpu_custom_call.1} parent=11 // pred_fallthru
          _
      $region12: #{tpu_custom_call.1} parent=5 // pred_fallthru
        _
      %p179 = scmp.lt.s32.totalorder %s14, 2
      // Predicated region
      $region25: #{tpu_custom_call.1} parent=5 // pred_check
        %p180 = pneg %p179
      $region26: #{tpu_custom_call.1} parent=5 // pred_check_branch
        %182 = sbr.rel (%p180) target = $region28
      $region27: #{tpu_custom_call.1} parent=5 // pred_region
        // Predicated region
        $region29: #{tpu_custom_call.1} parent=27 // pred_check
          %p183 = pneg %p34
        $region30: #{tpu_custom_call.1} parent=27 // pred_check_branch
          %185 = sbr.rel (%p183) target = $region32
        $region31: #{tpu_custom_call.1} parent=27 // pred_region
          %s186 = smul.u32 16, %s14
          %p187 = scmp.lt.s32.totalorder %s186, 31
          %s188 = scalar_select %p187, %s186, 31
          %s189 = smul.addr %s188, 8
          %s190 = scalar_lea.vmem %s0, %s189
          %s191 = smul.u32 16, %s14
        $region32: #{tpu_custom_call.1} parent=27 // pred_fallthru
          _
        // Predicated region
        $region33: #{tpu_custom_call.1} parent=27 // pred_check
          %p192 = pneg %p60
        $region34: #{tpu_custom_call.1} parent=27 // pred_check_branch
          %194 = sbr.rel (%p192) target = $region36
        $region35: #{tpu_custom_call.1} parent=27 // pred_region
          %s195 = smul.u32 16, %s14
          %p196 = scmp.lt.s32.totalorder %s195, 31
          %s197 = scalar_select %p196, %s195, 31
          %s198 = smul.addr %s197, 8
          %s199 = scalar_lea.vmem %s1, %s198
          %s200 = smul.u32 16, %s14
        $region36: #{tpu_custom_call.1} parent=27 // pred_fallthru
          _
      $region28: #{tpu_custom_call.1} parent=5 // pred_fallthru
        _
      %p201 = scmp.le.s32.totalorder 1, %s14
      %p202 = scmp.lt.s32.totalorder %s14, 3
      %p203 = pnand %p201, %p202
      %p204 = pneg %p203
      // Predicated region
      $region37: #{tpu_custom_call.1} parent=5 // pred_check
        _
      $region38: #{tpu_custom_call.1} parent=5 // pred_check_branch
        %206 = sbr.rel (%p203) target = $region40
      $region39: #{tpu_custom_call.1} parent=5 // pred_region
        %s207 = ssub.s32 %s14, 1
        %s208 = smul.u32 16, %s19
        %p209 = scmp.lt.s32.totalorder %s208, 31
        %s210 = scalar_select %p209, %s208, 31
        %s211 = smul.addr %s210, 8
        %s212 = scalar_lea.vmem %s0, %s211
        %p213 = pneg %p40
        %p214 = pneg %p37
        %s215 = smul.u32 16, %s19
        %p216 = scmp.lt.s32.totalorder %s215, 31
        %s217 = scalar_select %p216, %s215, 31
        %s218 = smul.addr %s217, 8
        %s219 = scalar_lea.vmem %s1, %s218
        %p220 = pneg %p66
        %p221 = pneg %p63
        %p222 = pneg %p87
        %p223 = pneg %p84
        %p224 = pneg %p108
        %p225 = pneg %p105
        %p226 = pneg %p129
        %p227 = pneg %p126
        %p228 = pneg %p155
        %p229 = pneg %p152
        %s230 = sand.u32 %s142, 1
        %s231 = scalar_lea.sflag [#allocation3], %s230
        %s232 = sand.u32 %s142, 1
        %s233 = smul.addr %s232, 8
        %s234 = scalar_lea.vmem [#allocation2], %s233
        %s235 = smul.u32 16, %s19
        %p236 = scmp.lt.s32.totalorder %s235, 31
        %s237 = scalar_select %p236, %s235, 31
        %s238 = smul.addr %s237, 8
        %s239 = scalar_lea.vmem %s0, %s238
        %s240 = smul.u32 16, %s19
        %s241 = smul.u32 16, %s19
        %p242 = scmp.lt.s32.totalorder %s241, 31
        %s243 = scalar_select %p242, %s241, 31
        %s244 = smul.addr %s243, 8
        %s245 = scalar_lea.vmem %s1, %s244
        %s246 = smul.u32 16, %s19
        %v247 = vld [vmem:[%s239] sm:$0xff]
        %v248 = vld [vmem:[%s239 + $0x8] sm:$0xff]
        %v249 = vld [vmem:[%s239 + $0x10] sm:$0xff]
        %v250 = vld [vmem:[%s239 + $0x18] sm:$0xff]
        %v251 = vld [vmem:[%s239 + $0x20] sm:$0xff]
        %v252 = vld [vmem:[%s239 + $0x28] sm:$0xff]
        %v253 = vld [vmem:[%s239 + $0x30] sm:$0xff]
        %v254 = vld [vmem:[%s239 + $0x38] sm:$0xff]
        %v255 = vld [vmem:[%s239 + $0x40] sm:$0xff]
        %v256 = vld [vmem:[%s239 + $0x48] sm:$0xff]
        %v257 = vld [vmem:[%s239 + $0x50] sm:$0xff]
        %v258 = vld [vmem:[%s239 + $0x58] sm:$0xff]
        %v259 = vld [vmem:[%s239 + $0x60] sm:$0xff]
        %v260 = vld [vmem:[%s239 + $0x68] sm:$0xff]
        %v261 = vld [vmem:[%s239 + $0x70] sm:$0xff]
        %v262 = vld [vmem:[%s239 + $0x78] sm:$0xff]
        %v263 = vld [vmem:[%s245] sm:$0xff]
        %v264 = vld [vmem:[%s245 + $0x8] sm:$0xff]
        %v265 = vld [vmem:[%s245 + $0x10] sm:$0xff]
        %v266 = vld [vmem:[%s245 + $0x18] sm:$0xff]
        %v267 = vld [vmem:[%s245 + $0x20] sm:$0xff]
        %v268 = vld [vmem:[%s245 + $0x28] sm:$0xff]
        %v269 = vld [vmem:[%s245 + $0x30] sm:$0xff]
        %v270 = vld [vmem:[%s245 + $0x38] sm:$0xff]
        %v271 = vld [vmem:[%s245 + $0x40] sm:$0xff]
        %v272 = vld [vmem:[%s245 + $0x48] sm:$0xff]
        %v273 = vld [vmem:[%s245 + $0x50] sm:$0xff]
        %v274 = vld [vmem:[%s245 + $0x58] sm:$0xff]
        %v275 = vld [vmem:[%s245 + $0x60] sm:$0xff]
        %v276 = vld [vmem:[%s245 + $0x68] sm:$0xff]
        %v277 = vld [vmem:[%s245 + $0x70] sm:$0xff]
        %v278 = vld [vmem:[%s245 + $0x78] sm:$0xff]
        %vm279 = vcmask 130048
        %v280 = vsel %vm279, %v247, 1.0
        %v281 = vsel %vm279, %v248, 1.0
        %v282 = vsel %vm279, %v249, 1.0
        %v283 = vsel %vm279, %v250, 1.0
        %v284 = vsel %vm279, %v251, 1.0
        %v285 = vsel %vm279, %v252, 1.0
        %v286 = vsel %vm279, %v253, 1.0
        %v287 = vsel %vm279, %v254, 1.0
        %v288 = vsel %vm279, %v255, 1.0
        %v289 = vsel %vm279, %v256, 1.0
        %v290 = vsel %vm279, %v257, 1.0
        %v291 = vsel %vm279, %v258, 1.0
        %v292 = vsel %vm279, %v259, 1.0
        %v293 = vsel %vm279, %v260, 1.0
        %v294 = vsel %vm279, %v261, 1.0
        %v295 = vsel %vm279, %v262, 1.0
        %297 = vset.pattern.permute.xlu0 0
        %298 = vperm.xlu0 %297, %v263
        %v299 = vpop.permute.xlu0 %298
        %302 = vset.pattern.permute.xlu0 0
        %303 = vperm.xlu0 %302, %v264
        %v304 = vpop.permute.xlu0 %303
        %307 = vset.pattern.permute.xlu0 0
        %308 = vperm.xlu0 %307, %v265
        %v309 = vpop.permute.xlu0 %308
        %312 = vset.pattern.permute.xlu0 0
        %313 = vperm.xlu0 %312, %v266
        %v314 = vpop.permute.xlu0 %313
        %317 = vset.pattern.permute.xlu0 0
        %318 = vperm.xlu0 %317, %v267
        %v319 = vpop.permute.xlu0 %318
        %322 = vset.pattern.permute.xlu0 0
        %323 = vperm.xlu0 %322, %v268
        %v324 = vpop.permute.xlu0 %323
        %327 = vset.pattern.permute.xlu0 0
        %328 = vperm.xlu0 %327, %v269
        %v329 = vpop.permute.xlu0 %328
        %332 = vset.pattern.permute.xlu0 0
        %333 = vperm.xlu0 %332, %v270
        %v334 = vpop.permute.xlu0 %333
        %337 = vset.pattern.permute.xlu0 0
        %338 = vperm.xlu0 %337, %v271
        %v339 = vpop.permute.xlu0 %338
        %342 = vset.pattern.permute.xlu0 0
        %343 = vperm.xlu0 %342, %v272
        %v344 = vpop.permute.xlu0 %343
        %347 = vset.pattern.permute.xlu0 0
        %348 = vperm.xlu0 %347, %v273
        %v349 = vpop.permute.xlu0 %348
        %352 = vset.pattern.permute.xlu0 0
        %353 = vperm.xlu0 %352, %v274
        %v354 = vpop.permute.xlu0 %353
        %357 = vset.pattern.permute.xlu0 0
        %358 = vperm.xlu0 %357, %v275
        %v359 = vpop.permute.xlu0 %358
        %362 = vset.pattern.permute.xlu0 0
        %363 = vperm.xlu0 %362, %v276
        %v364 = vpop.permute.xlu0 %363
        %367 = vset.pattern.permute.xlu0 0
        %368 = vperm.xlu0 %367, %v277
        %v369 = vpop.permute.xlu0 %368
        %372 = vset.pattern.permute.xlu0 0
        %373 = vperm.xlu0 %372, %v278
        %v374 = vpop.permute.xlu0 %373
        %v376 = vmul.f32 %v299, %v280
        %v377 = vmul.f32 %v304, %v281
        %v378 = vmul.f32 %v309, %v282
        %v379 = vmul.f32 %v314, %v283
        %v380 = vmul.f32 %v319, %v284
        %v381 = vmul.f32 %v324, %v285
        %v382 = vmul.f32 %v329, %v286
        %v383 = vmul.f32 %v334, %v287
        %v384 = vmul.f32 %v339, %v288
        %v385 = vmul.f32 %v344, %v289
        %v386 = vmul.f32 %v349, %v290
        %v387 = vmul.f32 %v354, %v291
        %v388 = vmul.f32 %v359, %v292
        %v389 = vmul.f32 %v364, %v293
        %v390 = vmul.f32 %v369, %v294
        %v391 = vmul.f32 %v374, %v295
        %392 = vset.pattern.permute.xlu0 1
        %393 = vperm.xlu0 %392, %v263
        %v394 = vpop.permute.xlu0 %393
        %396 = vset.pattern.permute.xlu0 1
        %397 = vperm.xlu0 %396, %v264
        %v398 = vpop.permute.xlu0 %397
        %400 = vset.pattern.permute.xlu0 1
        %401 = vperm.xlu0 %400, %v265
        %v402 = vpop.permute.xlu0 %401
        %404 = vset.pattern.permute.xlu0 1
        %405 = vperm.xlu0 %404, %v266
        %v406 = vpop.permute.xlu0 %405
        %408 = vset.pattern.permute.xlu0 1
        %409 = vperm.xlu0 %408, %v267
        %v410 = vpop.permute.xlu0 %409
        %412 = vset.pattern.permute.xlu0 1
        %413 = vperm.xlu0 %412, %v268
        %v414 = vpop.permute.xlu0 %413
        %416 = vset.pattern.permute.xlu0 1
        %417 = vperm.xlu0 %416, %v269
        %v418 = vpop.permute.xlu0 %417
        %420 = vset.pattern.permute.xlu0 1
        %421 = vperm.xlu0 %420, %v270
        %v422 = vpop.permute.xlu0 %421
        %424 = vset.pattern.permute.xlu0 1
        %425 = vperm.xlu0 %424, %v271
        %v426 = vpop.permute.xlu0 %425
        %428 = vset.pattern.permute.xlu0 1
        %429 = vperm.xlu0 %428, %v272
        %v430 = vpop.permute.xlu0 %429
        %432 = vset.pattern.permute.xlu0 1
        %433 = vperm.xlu0 %432, %v273
        %v434 = vpop.permute.xlu0 %433
        %436 = vset.pattern.permute.xlu0 1
        %437 = vperm.xlu0 %436, %v274
        %v438 = vpop.permute.xlu0 %437
        %440 = vset.pattern.permute.xlu0 1
        %441 = vperm.xlu0 %440, %v275
        %v442 = vpop.permute.xlu0 %441
        %444 = vset.pattern.permute.xlu0 1
        %445 = vperm.xlu0 %444, %v276
        %v446 = vpop.permute.xlu0 %445
        %448 = vset.pattern.permute.xlu0 1
        %449 = vperm.xlu0 %448, %v277
        %v450 = vpop.permute.xlu0 %449
        %452 = vset.pattern.permute.xlu0 1
        %453 = vperm.xlu0 %452, %v278
        %v454 = vpop.permute.xlu0 %453
        %v456 = vmul.f32 %v394, %v280
        %v457 = vmul.f32 %v398, %v281
        %v458 = vmul.f32 %v402, %v282
        %v459 = vmul.f32 %v406, %v283
        %v460 = vmul.f32 %v410, %v284
        %v461 = vmul.f32 %v414, %v285
        %v462 = vmul.f32 %v418, %v286
        %v463 = vmul.f32 %v422, %v287
        %v464 = vmul.f32 %v426, %v288
        %v465 = vmul.f32 %v430, %v289
        %v466 = vmul.f32 %v434, %v290
        %v467 = vmul.f32 %v438, %v291
        %v468 = vmul.f32 %v442, %v292
        %v469 = vmul.f32 %v446, %v293
        %v470 = vmul.f32 %v450, %v294
        %v471 = vmul.f32 %v454, %v295
        %472 = vset.pattern.permute.xlu0 2
        %473 = vperm.xlu0 %472, %v263
        %v474 = vpop.permute.xlu0 %473
        %476 = vset.pattern.permute.xlu0 2
        %477 = vperm.xlu0 %476, %v264
        %v478 = vpop.permute.xlu0 %477
        %480 = vset.pattern.permute.xlu0 2
        %481 = vperm.xlu0 %480, %v265
        %v482 = vpop.permute.xlu0 %481
        %484 = vset.pattern.permute.xlu0 2
        %485 = vperm.xlu0 %484, %v266
        %v486 = vpop.permute.xlu0 %485
        %488 = vset.pattern.permute.xlu0 2
        %489 = vperm.xlu0 %488, %v267
        %v490 = vpop.permute.xlu0 %489
        %492 = vset.pattern.permute.xlu0 2
        %493 = vperm.xlu0 %492, %v268
        %v494 = vpop.permute.xlu0 %493
        %496 = vset.pattern.permute.xlu0 2
        %497 = vperm.xlu0 %496, %v269
        %v498 = vpop.permute.xlu0 %497
        %500 = vset.pattern.permute.xlu0 2
        %501 = vperm.xlu0 %500, %v270
        %v502 = vpop.permute.xlu0 %501
        %504 = vset.pattern.permute.xlu0 2
        %505 = vperm.xlu0 %504, %v271
        %v506 = vpop.permute.xlu0 %505
        %508 = vset.pattern.permute.xlu0 2
        %509 = vperm.xlu0 %508, %v272
        %v510 = vpop.permute.xlu0 %509
        %512 = vset.pattern.permute.xlu0 2
        %513 = vperm.xlu0 %512, %v273
        %v514 = vpop.permute.xlu0 %513
        %516 = vset.pattern.permute.xlu0 2
        %517 = vperm.xlu0 %516, %v274
        %v518 = vpop.permute.xlu0 %517
        %520 = vset.pattern.permute.xlu0 2
        %521 = vperm.xlu0 %520, %v275
        %v522 = vpop.permute.xlu0 %521
        %524 = vset.pattern.permute.xlu0 2
        %525 = vperm.xlu0 %524, %v276
        %v526 = vpop.permute.xlu0 %525
        %528 = vset.pattern.permute.xlu0 2
        %529 = vperm.xlu0 %528, %v277
        %v530 = vpop.permute.xlu0 %529
        %532 = vset.pattern.permute.xlu0 2
        %533 = vperm.xlu0 %532, %v278
        %v534 = vpop.permute.xlu0 %533
        %v536 = vmul.f32 %v474, %v280
        %v537 = vmul.f32 %v478, %v281
        %v538 = vmul.f32 %v482, %v282
        %v539 = vmul.f32 %v486, %v283
        %v540 = vmul.f32 %v490, %v284
        %v541 = vmul.f32 %v494, %v285
        %v542 = vmul.f32 %v498, %v286
        %v543 = vmul.f32 %v502, %v287
        %v544 = vmul.f32 %v506, %v288
        %v545 = vmul.f32 %v510, %v289
        %v546 = vmul.f32 %v514, %v290
        %v547 = vmul.f32 %v518, %v291
        %v548 = vmul.f32 %v522, %v292
        %v549 = vmul.f32 %v526, %v293
        %v550 = vmul.f32 %v530, %v294
        %v551 = vmul.f32 %v534, %v295
        %552 = vset.pattern.permute.xlu0 3
        %553 = vperm.xlu0 %552, %v263
        %v554 = vpop.permute.xlu0 %553
        %556 = vset.pattern.permute.xlu0 3
        %557 = vperm.xlu0 %556, %v264
        %v558 = vpop.permute.xlu0 %557
        %560 = vset.pattern.permute.xlu0 3
        %561 = vperm.xlu0 %560, %v265
        %v562 = vpop.permute.xlu0 %561
        %564 = vset.pattern.permute.xlu0 3
        %565 = vperm.xlu0 %564, %v266
        %v566 = vpop.permute.xlu0 %565
        %568 = vset.pattern.permute.xlu0 3
        %569 = vperm.xlu0 %568, %v267
        %v570 = vpop.permute.xlu0 %569
        %572 = vset.pattern.permute.xlu0 3
        %573 = vperm.xlu0 %572, %v268
        %v574 = vpop.permute.xlu0 %573
        %576 = vset.pattern.permute.xlu0 3
        %577 = vperm.xlu0 %576, %v269
        %v578 = vpop.permute.xlu0 %577
        %580 = vset.pattern.permute.xlu0 3
        %581 = vperm.xlu0 %580, %v270
        %v582 = vpop.permute.xlu0 %581
        %584 = vset.pattern.permute.xlu0 3
        %585 = vperm.xlu0 %584, %v271
        %v586 = vpop.permute.xlu0 %585
        %588 = vset.pattern.permute.xlu0 3
        %589 = vperm.xlu0 %588, %v272
        %v590 = vpop.permute.xlu0 %589
        %592 = vset.pattern.permute.xlu0 3
        %593 = vperm.xlu0 %592, %v273
        %v594 = vpop.permute.xlu0 %593
        %596 = vset.pattern.permute.xlu0 3
        %597 = vperm.xlu0 %596, %v274
        %v598 = vpop.permute.xlu0 %597
        %600 = vset.pattern.permute.xlu0 3
        %601 = vperm.xlu0 %600, %v275
        %v602 = vpop.permute.xlu0 %601
        %604 = vset.pattern.permute.xlu0 3
        %605 = vperm.xlu0 %604, %v276
        %v606 = vpop.permute.xlu0 %605
        %608 = vset.pattern.permute.xlu0 3
        %609 = vperm.xlu0 %608, %v277
        %v610 = vpop.permute.xlu0 %609
        %612 = vset.pattern.permute.xlu0 3
        %613 = vperm.xlu0 %612, %v278
        %v614 = vpop.permute.xlu0 %613
        %v616 = vmul.f32 %v554, %v280
        %v617 = vmul.f32 %v558, %v281
        %v618 = vmul.f32 %v562, %v282
        %v619 = vmul.f32 %v566, %v283
        %v620 = vmul.f32 %v570, %v284
        %v621 = vmul.f32 %v574, %v285
        %v622 = vmul.f32 %v578, %v286
        %v623 = vmul.f32 %v582, %v287
        %v624 = vmul.f32 %v586, %v288
        %v625 = vmul.f32 %v590, %v289
        %v626 = vmul.f32 %v594, %v290
        %v627 = vmul.f32 %v598, %v291
        %v628 = vmul.f32 %v602, %v292
        %v629 = vmul.f32 %v606, %v293
        %v630 = vmul.f32 %v610, %v294
        %v631 = vmul.f32 %v614, %v295
        %648 = vrot.lane.b32.xlu0 %v456, 17
        %v649 = vpop.permute.xlu0 %648
        %650 = vrot.lane.b32.xlu0 %v457, 17
        %v651 = vpop.permute.xlu0 %650
        %652 = vrot.lane.b32.xlu0 %v458, 17
        %v653 = vpop.permute.xlu0 %652
        %654 = vrot.lane.b32.xlu0 %v459, 17
        %v655 = vpop.permute.xlu0 %654
        %656 = vrot.lane.b32.xlu0 %v460, 17
        %v657 = vpop.permute.xlu0 %656
        %658 = vrot.lane.b32.xlu0 %v461, 17
        %v659 = vpop.permute.xlu0 %658
        %660 = vrot.lane.b32.xlu0 %v462, 17
        %v661 = vpop.permute.xlu0 %660
        %662 = vrot.lane.b32.xlu0 %v463, 17
        %v663 = vpop.permute.xlu0 %662
        %664 = vrot.lane.b32.xlu0 %v464, 17
        %v665 = vpop.permute.xlu0 %664
        %666 = vrot.lane.b32.xlu0 %v465, 17
        %v667 = vpop.permute.xlu0 %666
        %668 = vrot.lane.b32.xlu0 %v466, 17
        %v669 = vpop.permute.xlu0 %668
        %670 = vrot.lane.b32.xlu0 %v467, 17
        %v671 = vpop.permute.xlu0 %670
        %672 = vrot.lane.b32.xlu0 %v468, 17
        %v673 = vpop.permute.xlu0 %672
        %674 = vrot.lane.b32.xlu0 %v469, 17
        %v675 = vpop.permute.xlu0 %674
        %676 = vrot.lane.b32.xlu0 %v470, 17
        %v677 = vpop.permute.xlu0 %676
        %678 = vrot.lane.b32.xlu0 %v471, 17
        %v679 = vpop.permute.xlu0 %678
        %712 = vrot.lane.b32.xlu0 %v536, 34
        %v713 = vpop.permute.xlu0 %712
        %714 = vrot.lane.b32.xlu0 %v537, 34
        %v715 = vpop.permute.xlu0 %714
        %716 = vrot.lane.b32.xlu0 %v538, 34
        %v717 = vpop.permute.xlu0 %716
        %718 = vrot.lane.b32.xlu0 %v539, 34
        %v719 = vpop.permute.xlu0 %718
        %720 = vrot.lane.b32.xlu0 %v540, 34
        %v721 = vpop.permute.xlu0 %720
        %722 = vrot.lane.b32.xlu0 %v541, 34
        %v723 = vpop.permute.xlu0 %722
        %724 = vrot.lane.b32.xlu0 %v542, 34
        %v725 = vpop.permute.xlu0 %724
        %726 = vrot.lane.b32.xlu0 %v543, 34
        %v727 = vpop.permute.xlu0 %726
        %728 = vrot.lane.b32.xlu0 %v544, 34
        %v729 = vpop.permute.xlu0 %728
        %730 = vrot.lane.b32.xlu0 %v545, 34
        %v731 = vpop.permute.xlu0 %730
        %732 = vrot.lane.b32.xlu0 %v546, 34
        %v733 = vpop.permute.xlu0 %732
        %734 = vrot.lane.b32.xlu0 %v547, 34
        %v735 = vpop.permute.xlu0 %734
        %736 = vrot.lane.b32.xlu0 %v548, 34
        %v737 = vpop.permute.xlu0 %736
        %738 = vrot.lane.b32.xlu0 %v549, 34
        %v739 = vpop.permute.xlu0 %738
        %740 = vrot.lane.b32.xlu0 %v550, 34
        %v741 = vpop.permute.xlu0 %740
        %742 = vrot.lane.b32.xlu0 %v551, 34
        %v743 = vpop.permute.xlu0 %742
        %776 = vrot.lane.b32.xlu0 %v616, 51
        %v777 = vpop.permute.xlu0 %776
        %778 = vrot.lane.b32.xlu0 %v617, 51
        %v779 = vpop.permute.xlu0 %778
        %780 = vrot.lane.b32.xlu0 %v618, 51
        %v781 = vpop.permute.xlu0 %780
        %782 = vrot.lane.b32.xlu0 %v619, 51
        %v783 = vpop.permute.xlu0 %782
        %784 = vrot.lane.b32.xlu0 %v620, 51
        %v785 = vpop.permute.xlu0 %784
        %786 = vrot.lane.b32.xlu0 %v621, 51
        %v787 = vpop.permute.xlu0 %786
        %788 = vrot.lane.b32.xlu0 %v622, 51
        %v789 = vpop.permute.xlu0 %788
        %790 = vrot.lane.b32.xlu0 %v623, 51
        %v791 = vpop.permute.xlu0 %790
        %792 = vrot.lane.b32.xlu0 %v624, 51
        %v793 = vpop.permute.xlu0 %792
        %794 = vrot.lane.b32.xlu0 %v625, 51
        %v795 = vpop.permute.xlu0 %794
        %796 = vrot.lane.b32.xlu0 %v626, 51
        %v797 = vpop.permute.xlu0 %796
        %798 = vrot.lane.b32.xlu0 %v627, 51
        %v799 = vpop.permute.xlu0 %798
        %800 = vrot.lane.b32.xlu0 %v628, 51
        %v801 = vpop.permute.xlu0 %800
        %802 = vrot.lane.b32.xlu0 %v629, 51
        %v803 = vpop.permute.xlu0 %802
        %804 = vrot.lane.b32.xlu0 %v630, 51
        %v805 = vpop.permute.xlu0 %804
        %806 = vrot.lane.b32.xlu0 %v631, 51
        %v807 = vpop.permute.xlu0 %806
        %840 = vrot.lane.b32.xlu0 %v280, 68
        %v841 = vpop.permute.xlu0 %840
        %842 = vrot.lane.b32.xlu0 %v281, 68
        %v843 = vpop.permute.xlu0 %842
        %844 = vrot.lane.b32.xlu0 %v282, 68
        %v845 = vpop.permute.xlu0 %844
        %846 = vrot.lane.b32.xlu0 %v283, 68
        %v847 = vpop.permute.xlu0 %846
        %848 = vrot.lane.b32.xlu0 %v284, 68
        %v849 = vpop.permute.xlu0 %848
        %850 = vrot.lane.b32.xlu0 %v285, 68
        %v851 = vpop.permute.xlu0 %850
        %852 = vrot.lane.b32.xlu0 %v286, 68
        %v853 = vpop.permute.xlu0 %852
        %854 = vrot.lane.b32.xlu0 %v287, 68
        %v855 = vpop.permute.xlu0 %854
        %856 = vrot.lane.b32.xlu0 %v288, 68
        %v857 = vpop.permute.xlu0 %856
        %858 = vrot.lane.b32.xlu0 %v289, 68
        %v859 = vpop.permute.xlu0 %858
        %860 = vrot.lane.b32.xlu0 %v290, 68
        %v861 = vpop.permute.xlu0 %860
        %862 = vrot.lane.b32.xlu0 %v291, 68
        %v863 = vpop.permute.xlu0 %862
        %864 = vrot.lane.b32.xlu0 %v292, 68
        %v865 = vpop.permute.xlu0 %864
        %866 = vrot.lane.b32.xlu0 %v293, 68
        %v867 = vpop.permute.xlu0 %866
        %868 = vrot.lane.b32.xlu0 %v294, 68
        %v869 = vpop.permute.xlu0 %868
        %870 = vrot.lane.b32.xlu0 %v295, 68
        %v871 = vpop.permute.xlu0 %870
        %vm888 = vcmask 138240
        %v889 = vsel %vm888, %v376, %v649
        %v890 = vsel %vm888, %v377, %v651
        %v891 = vsel %vm888, %v378, %v653
        %v892 = vsel %vm888, %v379, %v655
        %v893 = vsel %vm888, %v380, %v657
        %v894 = vsel %vm888, %v381, %v659
        %v895 = vsel %vm888, %v382, %v661
        %v896 = vsel %vm888, %v383, %v663
        %v897 = vsel %vm888, %v384, %v665
        %v898 = vsel %vm888, %v385, %v667
        %v899 = vsel %vm888, %v386, %v669
        %v900 = vsel %vm888, %v387, %v671
        %v901 = vsel %vm888, %v388, %v673
        %v902 = vsel %vm888, %v389, %v675
        %v903 = vsel %vm888, %v390, %v677
        %v904 = vsel %vm888, %v391, %v679
        %vm905 = vcmask 277504
        %v906 = vsel %vm905, %v889, %v713
        %v907 = vsel %vm905, %v890, %v715
        %v908 = vsel %vm905, %v891, %v717
        %v909 = vsel %vm905, %v892, %v719
        %v910 = vsel %vm905, %v893, %v721
        %v911 = vsel %vm905, %v894, %v723
        %v912 = vsel %vm905, %v895, %v725
        %v913 = vsel %vm905, %v896, %v727
        %v914 = vsel %vm905, %v897, %v729
        %v915 = vsel %vm905, %v898, %v731
        %v916 = vsel %vm905, %v899, %v733
        %v917 = vsel %vm905, %v900, %v735
        %v918 = vsel %vm905, %v901, %v737
        %v919 = vsel %vm905, %v902, %v739
        %v920 = vsel %vm905, %v903, %v741
        %v921 = vsel %vm905, %v904, %v743
        %vm922 = vcmask 416768
        %v923 = vsel %vm922, %v906, %v777
        %v924 = vsel %vm922, %v907, %v779
        %v925 = vsel %vm922, %v908, %v781
        %v926 = vsel %vm922, %v909, %v783
        %v927 = vsel %vm922, %v910, %v785
        %v928 = vsel %vm922, %v911, %v787
        %v929 = vsel %vm922, %v912, %v789
        %v930 = vsel %vm922, %v913, %v791
        %v931 = vsel %vm922, %v914, %v793
        %v932 = vsel %vm922, %v915, %v795
        %v933 = vsel %vm922, %v916, %v797
        %v934 = vsel %vm922, %v917, %v799
        %v935 = vsel %vm922, %v918, %v801
        %v936 = vsel %vm922, %v919, %v803
        %v937 = vsel %vm922, %v920, %v805
        %v938 = vsel %vm922, %v921, %v807
        %vm939 = vcmask 556032
        %v940 = vsel %vm939, %v923, %v841
        %v941 = vsel %vm939, %v924, %v843
        %v942 = vsel %vm939, %v925, %v845
        %v943 = vsel %vm939, %v926, %v847
        %v944 = vsel %vm939, %v927, %v849
        %v945 = vsel %vm939, %v928, %v851
        %v946 = vsel %vm939, %v929, %v853
        %v947 = vsel %vm939, %v930, %v855
        %v948 = vsel %vm939, %v931, %v857
        %v949 = vsel %vm939, %v932, %v859
        %v950 = vsel %vm939, %v933, %v861
        %v951 = vsel %vm939, %v934, %v863
        %v952 = vsel %vm939, %v935, %v865
        %v953 = vsel %vm939, %v936, %v867
        %v954 = vsel %vm939, %v937, %v869
        %v955 = vsel %vm939, %v938, %v871
        %v956 = vld [vmem:[%s2] sm:$0xff]
        %v957 = vld [vmem:[%s2 + $0x8] sm:$0xff]
        %v958 = vld [vmem:[%s2 + $0x10] sm:$0xff]
        %v959 = vld [vmem:[%s2 + $0x18] sm:$0xff]
        %v960 = vld [vmem:[%s2 + $0x20] sm:$0xff]
        %v961 = vld [vmem:[%s2 + $0x28] sm:$0xff]
        %v962 = vld [vmem:[%s2 + $0x30] sm:$0xff]
        %v963 = vld [vmem:[%s2 + $0x38] sm:$0xff]
        %v964 = vld [vmem:[%s2 + $0x40] sm:$0xff]
        %v965 = vld [vmem:[%s2 + $0x48] sm:$0xff]
        %v966 = vld [vmem:[%s2 + $0x50] sm:$0x1f]
        %vm967 = vcmask 695296
        %v969 = vsel %vm967, %v940, 0
        %v972 = vsel %vm967, %v941, 0
        %v975 = vsel %vm967, %v942, 0
        %v978 = vsel %vm967, %v943, 0
        %v981 = vsel %vm967, %v944, 0
        %v984 = vsel %vm967, %v945, 0
        %v987 = vsel %vm967, %v946, 0
        %v990 = vsel %vm967, %v947, 0
        %v993 = vsel %vm967, %v948, 0
        %v996 = vsel %vm967, %v949, 0
        %v999 = vsel %vm967, %v950, 0
        %v1002 = vsel %vm967, %v951, 0
        %v1005 = vsel %vm967, %v952, 0
        %v1008 = vsel %vm967, %v953, 0
        %v1011 = vsel %vm967, %v954, 0
        %v1014 = vsel %vm967, %v955, 0
        %vm1016 = vcmask 1044480
        %v1018 = vsel %vm1016, %v966, 0
        %1020 = vmatprep.subr.mxu0 0.0
        %1021 = vmatpush1.msra.mxu0 %v956
        %1022 = vmatprep.subr.mxu0 0.0
        %1023 = vmatpush1.msra.mxu0 %v957
        %1024 = vmatprep.subr.mxu0 0.0
        %1025 = vmatpush1.msra.mxu0 %v958
        %1026 = vmatprep.subr.mxu0 0.0
        %1027 = vmatpush1.msra.mxu0 %v959
        %1028 = vmatprep.subr.mxu0 0.0
        %1029 = vmatpush1.msra.mxu0 %v960
        %1030 = vmatprep.subr.mxu0 0.0
        %1031 = vmatpush1.msra.mxu0 %v961
        %1032 = vmatprep.subr.mxu0 0.0
        %1033 = vmatpush1.msra.mxu0 %v962
        %1034 = vmatprep.subr.mxu0 0.0
        %1035 = vmatpush1.msra.mxu0 %v963
        %1036 = vmatprep.subr.mxu0 0.0
        %1037 = vmatpush1.msra.mxu0 %v964
        %1038 = vmatprep.subr.mxu0 0.0
        %1039 = vmatpush1.msra.mxu0 %v965
        %1040 = vmatprep.subr.mxu0 0.0
        %1041 = vmatpush1.msra.mxu0 %v1018
        %1042 = vmatprep.subr.mxu0 0.0
        %1043 = vmatpush1.msra.mxu0 0.0
        %1044 = vmatprep.subr.mxu0 0.0
        %1045 = vmatpush1.msra.mxu0 0.0
        %1046 = vmatprep.subr.mxu0 0.0
        %1047 = vmatpush1.msra.mxu0 0.0
        %1048 = vmatprep.subr.mxu0 0.0
        %1049 = vmatpush1.msra.mxu0 0.0
        %1050 = vmatprep.subr.mxu0 0.0
        %1051 = vmatpush1.msra.mxu0 0.0
        %1052 = vmatprep.subr.mxu0 0.0
        %1053 = vmatpush1.msra.mxu0 0.0
        %1054 = vmatprep.subr.mxu0 0.0
        %1055 = vmatpush1.msra.mxu0 0.0
        %1056 = vmatprep.subr.mxu0 0.0
        %1057 = vmatpush1.msra.mxu0 0.0
        %1058 = vmatprep.subr.mxu0 0.0
        %1059 = vmatpush1.msra.mxu0 0.0
        %1060 = vmatprep.subr.mxu0 0.0
        %1061 = vmatpush1.msra.mxu0 0.0
        %1062 = vmatprep.subr.mxu0 0.0
        %1063 = vmatpush1.msra.mxu0 0.0
        %1064 = vmatprep.subr.mxu0 0.0
        %1065 = vmatpush1.msra.mxu0 0.0
        %1066 = vmatprep.subr.mxu0 0.0
        %1067 = vmatpush1.msra.mxu0 0.0
        %1068 = vmatprep.subr.mxu0 0.0
        %1069 = vmatpush1.msra.mxu0 0.0
        %1070 = vmatprep.subr.mxu0 0.0
        %1071 = vmatpush1.msra.mxu0 0.0
        %1072 = vmatprep.subr.mxu0 0.0
        %1073 = vmatpush1.msra.mxu0 0.0
        %1074 = vmatprep.subr.mxu0 0.0
        %1075 = vmatpush1.msra.mxu0 0.0
        %1076 = vmatprep.subr.mxu0 0.0
        %1077 = vmatpush1.msra.mxu0 0.0
        %1078 = vmatprep.subr.mxu0 0.0
        %1079 = vmatpush1.msra.mxu0 0.0
        %1080 = vmatprep.subr.mxu0 0.0
        %1081 = vmatpush1.msra.mxu0 0.0
        %1082 = vmatprep.subr.mxu0 0.0
        %1083 = vmatpush1.msra.mxu0 0.0
        %1084 = vmatprep.mubr.f32.mxu0 0.0
        %1085 = vmatmul.mubr.f32.gmra.mrb[0].mxu0 %v969
        %v1086 = vpop.f32.mrb[0].mxu0
        %v1087 = vadd.f32 0.0, %v1086
        %v1088 = vpop.f32.mrb[0].mxu0
        %1089 = vmatprep.mubr.f32.mxu0 0.0
        %1090 = vmatmul.mubr.f32.gmra.mrb[0].mxu0 %v972
        %v1091 = vpop.f32.mrb[0].mxu0
        %v1092 = vadd.f32 0.0, %v1091
        %v1093 = vpop.f32.mrb[0].mxu0
        %1094 = vmatprep.mubr.f32.mxu0 0.0
        %1095 = vmatmul.mubr.f32.gmra.mrb[0].mxu0 %v975
        %v1096 = vpop.f32.mrb[0].mxu0
        %v1097 = vadd.f32 0.0, %v1096
        %v1098 = vpop.f32.mrb[0].mxu0
        %1099 = vmatprep.mubr.f32.mxu0 0.0
        %1100 = vmatmul.mubr.f32.gmra.mrb[0].mxu0 %v978
        %v1101 = vpop.f32.mrb[0].mxu0
        %v1102 = vadd.f32 0.0, %v1101
        %v1103 = vpop.f32.mrb[0].mxu0
        %1104 = vmatprep.mubr.f32.mxu0 0.0
        %1105 = vmatmul.mubr.f32.gmra.mrb[0].mxu0 %v981
        %v1106 = vpop.f32.mrb[0].mxu0
        %v1107 = vadd.f32 0.0, %v1106
        %v1108 = vpop.f32.mrb[0].mxu0
        %1109 = vmatprep.mubr.f32.mxu0 0.0
        %1110 = vmatmul.mubr.f32.gmra.mrb[0].mxu0 %v984
        %v1111 = vpop.f32.mrb[0].mxu0
        %v1112 = vadd.f32 0.0, %v1111
        %v1113 = vpop.f32.mrb[0].mxu0
        %1114 = vmatprep.mubr.f32.mxu0 0.0
        %1115 = vmatmul.mubr.f32.gmra.mrb[0].mxu0 %v987
        %v1116 = vpop.f32.mrb[0].mxu0
        %v1117 = vadd.f32 0.0, %v1116
        %v1118 = vpop.f32.mrb[0].mxu0
        %1119 = vmatprep.mubr.f32.mxu0 0.0
        %1120 = vmatmul.mubr.f32.gmra.mrb[0].mxu0 %v990
        %v1121 = vpop.f32.mrb[0].mxu0
        %v1122 = vadd.f32 0.0, %v1121
        %v1123 = vpop.f32.mrb[0].mxu0
        %1124 = vmatprep.mubr.f32.mxu0 0.0
        %1125 = vmatmul.mubr.f32.gmra.mrb[0].mxu0 %v993
        %v1126 = vpop.f32.mrb[0].mxu0
        %v1127 = vadd.f32 0.0, %v1126
        %v1128 = vpop.f32.mrb[0].mxu0
        %1129 = vmatprep.mubr.f32.mxu0 0.0
        %1130 = vmatmul.mubr.f32.gmra.mrb[0].mxu0 %v996
        %v1131 = vpop.f32.mrb[0].mxu0
        %v1132 = vadd.f32 0.0, %v1131
        %v1133 = vpop.f32.mrb[0].mxu0
        %1134 = vmatprep.mubr.f32.mxu0 0.0
        %1135 = vmatmul.mubr.f32.gmra.mrb[0].mxu0 %v999
        %v1136 = vpop.f32.mrb[0].mxu0
        %v1137 = vadd.f32 0.0, %v1136
        %v1138 = vpop.f32.mrb[0].mxu0
        %1139 = vmatprep.mubr.f32.mxu0 0.0
        %1140 = vmatmul.mubr.f32.gmra.mrb[0].mxu0 %v1002
        %v1141 = vpop.f32.mrb[0].mxu0
        %v1142 = vadd.f32 0.0, %v1141
        %v1143 = vpop.f32.mrb[0].mxu0
        %1144 = vmatprep.mubr.f32.mxu0 0.0
        %1145 = vmatmul.mubr.f32.gmra.mrb[0].mxu0 %v1005
        %v1146 = vpop.f32.mrb[0].mxu0
        %v1147 = vadd.f32 0.0, %v1146
        %v1148 = vpop.f32.mrb[0].mxu0
        %1149 = vmatprep.mubr.f32.mxu0 0.0
        %1150 = vmatmul.mubr.f32.gmra.mrb[0].mxu0 %v1008
        %v1151 = vpop.f32.mrb[0].mxu0
        %v1152 = vadd.f32 0.0, %v1151
        %v1153 = vpop.f32.mrb[0].mxu0
        %1154 = vmatprep.mubr.f32.mxu0 0.0
        %1155 = vmatmul.mubr.f32.gmra.mrb[0].mxu0 %v1011
        %v1156 = vpop.f32.mrb[0].mxu0
        %v1157 = vadd.f32 0.0, %v1156
        %v1158 = vpop.f32.mrb[0].mxu0
        %1159 = vmatprep.mubr.f32.mxu0 0.0
        %1160 = vmatmul.mubr.f32.gmra.mrb[0].mxu0 %v1014
        %v1161 = vpop.f32.mrb[0].mxu0
        %v1162 = vadd.f32 0.0, %v1161
        %v1163 = vpop.f32.mrb[0].mxu0
        %1164 = vdwg.mxu0
        %v1165 = vmul.f32 %v1087, %v554
        %v1166 = vmul.f32 %v1092, %v558
        %v1167 = vmul.f32 %v1097, %v562
        %v1168 = vmul.f32 %v1102, %v566
        %v1169 = vmul.f32 %v1107, %v570
        %v1170 = vmul.f32 %v1112, %v574
        %v1171 = vmul.f32 %v1117, %v578
        %v1172 = vmul.f32 %v1122, %v582
        %v1173 = vmul.f32 %v1127, %v586
        %v1174 = vmul.f32 %v1132, %v590
        %v1175 = vmul.f32 %v1137, %v594
        %v1176 = vmul.f32 %v1142, %v598
        %v1177 = vmul.f32 %v1147, %v602
        %v1178 = vmul.f32 %v1152, %v606
        %v1179 = vmul.f32 %v1157, %v610
        %v1180 = vmul.f32 %v1162, %v614
        %v1181 = vld [vmem:[%s3] sm:$0xff]
        %v1182 = vld [vmem:[%s4] sm:$0xff]
        %1184 = vset.pattern.permute.xlu0 0
        %1185 = vperm.xlu0 %1184, %v1182
        %v1186 = vpop.permute.xlu0 %1185
        %vm1188 = vcmask 261120
        %v1190 = vsel %vm1188, %v1181, 0
        %v1193 = vsel %vm1188, %v1165, 0
        %v1196 = vsel %vm1188, %v1166, 0
        %v1199 = vsel %vm1188, %v1167, 0
        %v1202 = vsel %vm1188, %v1168, 0
        %v1205 = vsel %vm1188, %v1169, 0
        %v1208 = vsel %vm1188, %v1170, 0
        %v1211 = vsel %vm1188, %v1171, 0
        %v1214 = vsel %vm1188, %v1172, 0
        %v1217 = vsel %vm1188, %v1173, 0
        %v1220 = vsel %vm1188, %v1174, 0
        %v1223 = vsel %vm1188, %v1175, 0
        %v1226 = vsel %vm1188, %v1176, 0
        %v1229 = vsel %vm1188, %v1177, 0
        %v1232 = vsel %vm1188, %v1178, 0
        %v1235 = vsel %vm1188, %v1179, 0
        %v1238 = vsel %vm1188, %v1180, 0
        %1240 = vmatprep.subr.mxu0 0.0
        %1241 = vmatpush1.xpose.msra.mxu0 %v1193
        %1242 = vmatprep.subr.mxu0 0.0
        %1243 = vmatpush1.xpose.msra.mxu0 %v1196
        %1244 = vmatprep.subr.mxu0 0.0
        %1245 = vmatpush1.xpose.msra.mxu0 %v1199
        %1246 = vmatprep.subr.mxu0 0.0
        %1247 = vmatpush1.xpose.msra.mxu0 %v1202
        %1248 = vmatprep.subr.mxu0 0.0
        %1249 = vmatpush1.xpose.msra.mxu0 %v1205
        %1250 = vmatprep.subr.mxu0 0.0
        %1251 = vmatpush1.xpose.msra.mxu0 %v1208
        %1252 = vmatprep.subr.mxu0 0.0
        %1253 = vmatpush1.xpose.msra.mxu0 %v1211
        %1254 = vmatprep.subr.mxu0 0.0
        %1255 = vmatpush1.xpose.msra.mxu0 %v1214
        %1256 = vmatprep.subr.mxu0 0.0
        %1257 = vmatpush1.xpose.msra.mxu0 %v1217
        %1258 = vmatprep.subr.mxu0 0.0
        %1259 = vmatpush1.xpose.msra.mxu0 %v1220
        %1260 = vmatprep.subr.mxu0 0.0
        %1261 = vmatpush1.xpose.msra.mxu0 %v1223
        %1262 = vmatprep.subr.mxu0 0.0
        %1263 = vmatpush1.xpose.msra.mxu0 %v1226
        %1264 = vmatprep.subr.mxu0 0.0
        %1265 = vmatpush1.xpose.msra.mxu0 %v1229
        %1266 = vmatprep.subr.mxu0 0.0
        %1267 = vmatpush1.xpose.msra.mxu0 %v1232
        %1268 = vmatprep.subr.mxu0 0.0
        %1269 = vmatpush1.xpose.msra.mxu0 %v1235
        %1270 = vmatprep.subr.mxu0 0.0
        %1271 = vmatpush1.xpose.msra.mxu0 %v1238
        %1272 = vmatprep.subr.mxu0 0.0
        %1273 = vmatpush1.xpose.msra.mxu0 0.0
        %1274 = vmatprep.subr.mxu0 0.0
        %1275 = vmatpush1.xpose.msra.mxu0 0.0
        %1276 = vmatprep.subr.mxu0 0.0
        %1277 = vmatpush1.xpose.msra.mxu0 0.0
        %1278 = vmatprep.subr.mxu0 0.0
        %1279 = vmatpush1.xpose.msra.mxu0 0.0
        %1280 = vmatprep.subr.mxu0 0.0
        %1281 = vmatpush1.xpose.msra.mxu0 0.0
        %1282 = vmatprep.subr.mxu0 0.0
        %1283 = vmatpush1.xpose.msra.mxu0 0.0
        %1284 = vmatprep.subr.mxu0 0.0
        %1285 = vmatpush1.xpose.msra.mxu0 0.0
        %1286 = vmatprep.subr.mxu0 0.0
        %1287 = vmatpush1.xpose.msra.mxu0 0.0
        %1288 = vmatprep.subr.mxu0 0.0
        %1289 = vmatpush1.xpose.msra.mxu0 0.0
        %1290 = vmatprep.subr.mxu0 0.0
        %1291 = vmatpush1.xpose.msra.mxu0 0.0
        %1292 = vmatprep.subr.mxu0 0.0
        %1293 = vmatpush1.xpose.msra.mxu0 0.0
        %1294 = vmatprep.subr.mxu0 0.0
        %1295 = vmatpush1.xpose.msra.mxu0 0.0
        %1296 = vmatprep.subr.mxu0 0.0
        %1297 = vmatpush1.xpose.msra.mxu0 0.0
        %1298 = vmatprep.subr.mxu0 0.0
        %1299 = vmatpush1.xpose.msra.mxu0 0.0
        %1300 = vmatprep.subr.mxu0 0.0
        %1301 = vmatpush1.xpose.msra.mxu0 0.0
        %1302 = vmatprep.subr.mxu0 0.0
        %1303 = vmatpush1.xpose.msra.mxu0 0.0
        %1304 = vmatprep.mubr.f32.mxu0 0.0
        %1305 = vmatmul.mubr.f32.gmra.mrb[0].mxu0 %v1190
        %v1306 = vpop.f32.mrb[0].mxu0
        %v1307 = vadd.f32 %v1186, %v1306
        %v1308 = vpop.f32.mrb[0].mxu0
        %1309 = vdwg.mxu0
        %1310 = vst [vmem:[%s234] sm:$0xff] %v1307
        %s1311 = sand.u32 %s142, 1
        %s1312 = scalar_lea.sflag [#allocation3], %s1311
        %s1313 = sand.u32 %s142, 1
        %s1314 = smul.addr %s1313, 8
        %s1315 = scalar_lea.vmem [#allocation2], %s1314
        // Predicated region
        $region41: #{tpu_custom_call.1} parent=39 // pred_check
          %p1316 = pneg %p152
        $region42: #{tpu_custom_call.1} parent=39 // pred_check_branch
          %1318 = sbr.rel (%p1316) target = $region44
        $region43: #{tpu_custom_call.1} parent=39 // pred_region
          %s1320 = ssub.s32 128, 128
          %1321 = vsyncadd %s1312, %s1320
          %s1322 = smul.addr %s19, 128
          %s1323 = scalar_lea.hbm %s5, %s1322
          %s1325 = sshll.u32 %s1315, 4
          %s1326 = int_to_ptr.vmem [resolvable:$true] %s1325
          %1328 = dma.vmem_to_hbm [thread:$0]  %s1326, 128, %s1323, %s1312
        $region44: #{tpu_custom_call.1} parent=39 // pred_fallthru
          _
      $region40: #{tpu_custom_call.1} parent=5 // pred_fallthru
        _
      %p1329 = scmp.le.s32.totalorder 2, %s14
      // Predicated region
      $region45: #{tpu_custom_call.1} parent=5 // pred_check
        %p1330 = pneg %p1329
      $region46: #{tpu_custom_call.1} parent=5 // pred_check_branch
        %1332 = sbr.rel (%p1330) target = $region48
      $region47: #{tpu_custom_call.1} parent=5 // pred_region
        %s1333 = ssub.s32 %s14, 2
        // Predicated region
        $region49: #{tpu_custom_call.1} parent=47 // pred_check
          %p1334 = pneg %p158
        $region50: #{tpu_custom_call.1} parent=47 // pred_check_branch
          %1336 = sbr.rel (%p1334) target = $region52
        $region51: #{tpu_custom_call.1} parent=47 // pred_region
          %s1337 = sand.u32 %s143, 1
          %s1338 = scalar_lea.sflag [#allocation3], %s1337
          %s1339 = sand.u32 %s143, 1
          %s1340 = smul.addr %s1339, 8
          %s1341 = scalar_lea.vmem [#allocation2], %s1340
          %1342 = dma.done %s1338, 128
        $region52: #{tpu_custom_call.1} parent=47 // pred_fallthru
          _
      $region48: #{tpu_custom_call.1} parent=5 // pred_fallthru
        _
    $region6: #{tpu_custom_call.1} parent=1 // loop_footer
      %s18 = sadd.s32 1, %s14
    $region7: #{tpu_custom_call.1} parent=1 // loop_footer_branch
      %13 = sbr.rel target = $region3
    $region8: #{tpu_custom_call.1} parent=1 // loop_exit
      _
    %1343 = vsyncpa [#allocation3], 1
    %s1344 = scalar_lea.sflag [#allocation3], 1
    %1345 = vsyncpa %s1344, 1

</llo_original>
